<compile_context>
chip_gen: v5e
topology: v5e:2x2
jax: 0.10.0
libtpu: 0.0.40
codegen_flags: <defaults>
</compile_context>

<pallas_src>
import jax
import jax.numpy as jnp
from jax.experimental import pallas as pl
from jax.experimental.pallas import tpu as pltpu

HIDDEN = 1024  # hardcoded in the PyTorch module


def _round_up(n, m):
    return ((n + m - 1) // m) * m


def _regress_head_kernel(x_ref, w1_ref, b1_ref, w2_ref, b2_ref, o_ref):
    # First linear (MXU, f32 accumulate) + bias + ReLU (VPU, f32).
    h = jnp.dot(x_ref[...], w1_ref[...], preferred_element_type=jnp.float32)
    h = jnp.maximum(h + b1_ref[...], 0.0)          # (tm, 1024) + (1, 1024), f32
    # Feed the MXU in the weights' dtype (bf16 when enabled); accumulate in f32.
    h = h.astype(w2_ref.dtype)
    y = jnp.dot(h, w2_ref[...], preferred_element_type=jnp.float32)
    o_ref[...] = (y + b2_ref[...]).astype(o_ref.dtype)   # lane-dense (tm, out_pad) store


def regress_head_forward(x, w1, b1, w2, b2, *, tm=None, use_bf16=True):
    """x: (B, input_size); w1: (input_size, 1024); w2: (1024, out_f).
    Returns (B, out_f) float32."""
    B, in_f = x.shape
    hid = w1.shape[1]
    out_f = w2.shape[1]
    assert w1.shape == (in_f, hid)
    assert b1.shape == (1, hid)
    assert w2.shape == (hid, out_f)
    assert b2.shape == (1, out_f)

    # --- Pad the output feature dim to a 128-lane multiple (unmasked stores). ---
    out_pad = _round_up(max(out_f, 128), 128)
    if out_pad != out_f:
        w2p = jnp.zeros((hid, out_pad), w2.dtype).at[:, :out_f].set(w2)
        b2p = jnp.zeros((1, out_pad), b2.dtype).at[:, :out_f].set(b2)
    else:
        w2p, b2p = w2, b2

    # --- Batch tiling: cap tile at 256 rows, sublane-aligned, grid over batch. ---
    if tm is None:
        tm = min(256, _round_up(B, 8))
    tm = max(8, _round_up(tm, 8))
    Bp = _round_up(B, tm)
    xp = x if Bp == B else jnp.zeros((Bp, in_f), x.dtype).at[:B, :].set(x)

    # --- bf16 feed to the MXU (f32 accumulate inside the kernel). ---
    if use_bf16:
        xp = xp.astype(jnp.bfloat16)
        w1k = w1.astype(jnp.bfloat16)
        w2k = w2p.astype(jnp.bfloat16)
    else:
        w1k = w1
        w2k = w2p
    b1k = b1.astype(jnp.float32)
    b2k = b2p.astype(jnp.float32)

    grid = (Bp // tm,)

    flops = 2 * Bp * (in_f * hid + hid * out_pad)
    bytes_accessed = int(
        xp.size * xp.dtype.itemsize
        + w1k.size * w1k.dtype.itemsize
        + w2k.size * w2k.dtype.itemsize
        + b1k.size * 4 + b2k.size * 4
        + Bp * out_pad * 4
    )

    out = pl.pallas_call(
        _regress_head_kernel,
        out_shape=jax.ShapeDtypeStruct((Bp, out_pad), jnp.float32),
        grid_spec=pl.GridSpec(
            grid=grid,
            in_specs=[
                pl.BlockSpec((tm, in_f), lambda i: (i, 0)),      # x tile (streamed)
                pl.BlockSpec((in_f, hid), lambda i: (0, 0)),     # W1 (grid-invariant)
                pl.BlockSpec((1, hid), lambda i: (0, 0)),        # b1
                pl.BlockSpec((hid, out_pad), lambda i: (0, 0)),  # W2 padded (grid-invariant)
                pl.BlockSpec((1, out_pad), lambda i: (0, 0)),    # b2 padded
            ],
            out_specs=pl.BlockSpec((tm, out_pad), lambda i: (i, 0)),
        ),
        compiler_params=pltpu.CompilerParams(
            dimension_semantics=("parallel",),
        ),
        cost_estimate=pl.CostEstimate(
            flops=flops, transcendentals=0, bytes_accessed=bytes_accessed),
    )(xp, w1k, b1k, w2k, b2k)

    # Strip batch and output-feature padding.
    return out[:B, :out_f]


def init_params(key, input_size, n_class, regress_dim):
    """Deterministic synthetic parameters matching the PyTorch module's shapes
    (weights stored as (in, out) = transpose of PyTorch's (out, in) Linear weights)."""
    out_f = n_class * regress_dim
    k1, k2, k3, k4 = jax.random.split(key, 4)
    w1 = jax.random.normal(k1, (input_size, HIDDEN), jnp.float32) * 0.02
    b1 = jax.random.normal(k2, (1, HIDDEN), jnp.float32) * 0.01
    w2 = jax.random.normal(k3, (HIDDEN, out_f), jnp.float32) * 0.02
    b2 = jax.random.normal(k4, (1, out_f), jnp.float32) * 0.01
    return w1, b1, w2, b2


if __name__ == "__main__":
    # Small shapes consistent with the module: batch=8, input_size=32,
    # n_class=4, regress_dim=3 -> output features = 12.
    B, INPUT_SIZE, N_CLASS, REGRESS_DIM = 8, 32, 4, 3

    key = jax.random.PRNGKey(0)
    kx, kp = jax.random.split(key)
    x = jax.random.normal(kx, (B, INPUT_SIZE), jnp.float32)
    w1, b1, w2, b2 = init_params(kp, INPUT_SIZE, N_CLASS, REGRESS_DIM)

    # --- f32 path: exact check against the PyTorch-equivalent reference. ---
    out_f32 = regress_head_forward(x, w1, b1, w2, b2, use_bf16=False)
    jax.block_until_ready(out_f32)
    ref_f32 = jnp.maximum(x @ w1 + b1, 0.0) @ w2 + b2
    assert out_f32.shape == (B, N_CLASS * REGRESS_DIM)
    assert jnp.allclose(out_f32, ref_f32, atol=1e-5, rtol=1e-5)

    # --- bf16-fed MXU path (default): compare against a bf16-rounded reference. ---
    out_bf = regress_head_forward(x, w1, b1, w2, b2, use_bf16=True)
    jax.block_until_ready(out_bf)
    xb = x.astype(jnp.bfloat16).astype(jnp.float32)
    w1b = w1.astype(jnp.bfloat16).astype(jnp.float32)
    w2b = w2.astype(jnp.bfloat16).astype(jnp.float32)
    h_ref = jnp.maximum(xb @ w1b + b1, 0.0).astype(jnp.bfloat16).astype(jnp.float32)
    ref_bf = h_ref @ w2b + b2
    assert out_bf.shape == (B, N_CLASS * REGRESS_DIM)
    assert jnp.allclose(out_bf, ref_bf, atol=1e-2, rtol=1e-2)

    print("KERNEL_OK")
</pallas_src>

<mosaic_0001>
module attributes {stable_mosaic.version = 11 : i64} {
  func.func @_regress_head_kernel(%arg0: i32, %arg1: memref<8x32xf32, #tpu.memory_space<vmem>>, %arg2: memref<32x1024xf32, #tpu.memory_space<vmem>>, %arg3: memref<1x1024xf32, #tpu.memory_space<vmem>>, %arg4: memref<1024x128xf32, #tpu.memory_space<vmem>>, %arg5: memref<1x128xf32, #tpu.memory_space<vmem>>, %arg6: memref<8x128xf32, #tpu.memory_space<vmem>>) attributes {dimension_semantics = [#tpu.dimension_semantics<parallel>], iteration_bounds = array<i64: 1>, scalar_prefetch = 0 : i64, scratch_operands = 0 : i64, tpu.core_type = #tpu.core_type<tc>, window_params = [{transform_indices = @transform_0, window_bounds = array<i64: 8, 32>}, {pipeline_mode = #tpu.pipeline_mode<synchronous>, transform_indices = @transform_1, window_bounds = array<i64: 32, 1024>}, {pipeline_mode = #tpu.pipeline_mode<synchronous>, transform_indices = @transform_2, window_bounds = array<i64: 1, 1024>}, {pipeline_mode = #tpu.pipeline_mode<synchronous>, transform_indices = @transform_3, window_bounds = array<i64: 1024, 128>}, {pipeline_mode = #tpu.pipeline_mode<synchronous>, transform_indices = @transform_4, window_bounds = array<i64: 1, 128>}, {transform_indices = @transform_5, window_bounds = array<i64: 8, 128>}]} {
    %c0 = arith.constant 0 : index
    %c0_0 = arith.constant 0 : index
    %0 = vector.load %arg1[%c0, %c0_0] : memref<8x32xf32, #tpu.memory_space<vmem>>, vector<8x32xf32>
    %c0_1 = arith.constant 0 : index
    %c0_2 = arith.constant 0 : index
    %1 = vector.load %arg2[%c0_1, %c0_2] : memref<32x1024xf32, #tpu.memory_space<vmem>>, vector<32x1024xf32>
    %cst = arith.constant dense<0.000000e+00> : vector<8x1024xf32>
    %2 = tpu.matmul %0, %1, %cst {dimension_numbers = #tpu.dot_dimension_numbers<[1], [0], [0], [1], [0, 0, 1, 1], [], []>} : vector<8x32xf32>, vector<32x1024xf32>, vector<8x1024xf32> -> vector<8x1024xf32>
    %c0_3 = arith.constant 0 : index
    %c0_4 = arith.constant 0 : index
    %3 = vector.load %arg3[%c0_3, %c0_4] : memref<1x1024xf32, #tpu.memory_space<vmem>>, vector<1x1024xf32>
    %4 = vector.broadcast %3 : vector<1x1024xf32> to vector<8x1024xf32>
    %5 = arith.addf %2, %4 : vector<8x1024xf32>
    %cst_5 = arith.constant 0.000000e+00 : f32
    %6 = vector.broadcast %cst_5 : f32 to vector<8x1024xf32>
    %7 = arith.maximumf %5, %6 : vector<8x1024xf32>
    %c0_6 = arith.constant 0 : index
    %c0_7 = arith.constant 0 : index
    %8 = vector.load %arg4[%c0_6, %c0_7] : memref<1024x128xf32, #tpu.memory_space<vmem>>, vector<1024x128xf32>
    %cst_8 = arith.constant dense<0.000000e+00> : vector<8x128xf32>
    %9 = tpu.matmul %7, %8, %cst_8 {dimension_numbers = #tpu.dot_dimension_numbers<[1], [0], [0], [1], [0, 0, 1, 1], [], []>} : vector<8x1024xf32>, vector<1024x128xf32>, vector<8x128xf32> -> vector<8x128xf32>
    %c0_9 = arith.constant 0 : index
    %c0_10 = arith.constant 0 : index
    %10 = vector.load %arg5[%c0_9, %c0_10] : memref<1x128xf32, #tpu.memory_space<vmem>>, vector<1x128xf32>
    %11 = vector.broadcast %10 : vector<1x128xf32> to vector<8x128xf32>
    %12 = arith.addf %9, %11 : vector<8x128xf32>
    %c0_11 = arith.constant 0 : index
    %c0_12 = arith.constant 0 : index
    %13 = vector.load %arg6[%c0_11, %c0_12] : memref<8x128xf32, #tpu.memory_space<vmem>>, vector<8x128xf32>
    tpu.vector_store %arg6[%c0_11, %c0_12], %12 {strides = array<i32>} : memref<8x128xf32, #tpu.memory_space<vmem>>, vector<8x128xf32>,
    return
  }
  func.func @transform_0(%arg0: i32) -> (i32, i32) {
    %c0_i32 = arith.constant 0 : i32
    %c0_i32_0 = arith.constant 0 : i32
    return %arg0, %c0_i32 : i32, i32
  }
  func.func @transform_1(%arg0: i32) -> (i32, i32) {
    %c0_i32 = arith.constant 0 : i32
    %c0_i32_0 = arith.constant 0 : i32
    %c0_i32_1 = arith.constant 0 : i32
    return %c0_i32, %c0_i32_0 : i32, i32
  }
  func.func @transform_2(%arg0: i32) -> (i32, i32) {
    %c0_i32 = arith.constant 0 : i32
    %c0_i32_0 = arith.constant 0 : i32
    %c0_i32_1 = arith.constant 0 : i32
    return %c0_i32, %c0_i32_0 : i32, i32
  }
  func.func @transform_3(%arg0: i32) -> (i32, i32) {
    %c0_i32 = arith.constant 0 : i32
    %c0_i32_0 = arith.constant 0 : i32
    %c0_i32_1 = arith.constant 0 : i32
    return %c0_i32, %c0_i32_0 : i32, i32
  }
  func.func @transform_4(%arg0: i32) -> (i32, i32) {
    %c0_i32 = arith.constant 0 : i32
    %c0_i32_0 = arith.constant 0 : i32
    %c0_i32_1 = arith.constant 0 : i32
    return %c0_i32, %c0_i32_0 : i32, i32
  }
  func.func @transform_5(%arg0: i32) -> (i32, i32) {
    %c0_i32 = arith.constant 0 : i32
    %c0_i32_0 = arith.constant 0 : i32
    return %arg0, %c0_i32 : i32, i32
  }
}

</mosaic_0001>

<llo_original>
// kernel: tpu_custom_call.1
$region0: #{tpu_custom_call.1}
  #allocation0 [shape = 'u32[]', space=smem, size = 0x4, offset = 0x4, fixed_abs, tag = 'smem constant byte address 0x4 - core index']
  #allocation1 [shape = 'u32[72,128]{1,0:T(1,128)}', space=vmem, size = 0x9000, scoped, tag = 'internal scratch']
  %s0 = inlined_call_operand.hbm [shape: f32[8,32], index: 0, kind: input, shape index: {}]
  %s1 = inlined_call_operand.hbm [shape: f32[32,1024], index: 1, kind: input, shape index: {}]
  %s2 = inlined_call_operand.hbm [shape: f32[1,1024], index: 2, kind: input, shape index: {}]
  %s3 = inlined_call_operand.hbm [shape: f32[1024,128], index: 3, kind: input, shape index: {}]
  %s4 = inlined_call_operand.vmem [shape: f32[1,128], index: 4, kind: input, shape index: {}]
  %s5 = inlined_call_operand.hbm [shape: f32[8,128], index: 5, kind: output, shape index: {}]
  %s6 = sld [smem:[#allocation0]]
  $region46: #{tpu_custom_call.1} parent=0
    _
  %s8 = ssub.s32 1, %s6
  %s9 = scalar_select 0, %s8, %s6
  $region1: #{tpu_custom_call.1} parent=0
    #allocation2 [shape = 'u8[4096]{0}', space=vmem, size = 0x1000, scoped, tag = 'input window, operand 0, single buffered']
    #allocation3 [shape = 's32[1]{0}', space=sflag, size = 0x4, scoped, tag = 'scoped memory for tpu_custom_call.1']
    #allocation4 [shape = 's32[1]{0}', space=sflag, size = 0x4, scoped, tag = 'scoped memory for tpu_custom_call.1']
    #allocation5 [shape = 'u8[131072]{0}', space=vmem, size = 0x20000, scoped, tag = 'input window, operand 1, single buffered']
    #allocation6 [shape = 's32[1]{0}', space=sflag, size = 0x4, scoped, tag = 'scoped memory for tpu_custom_call.1']
    #allocation7 [shape = 'u8[4096]{0}', space=vmem, size = 0x1000, scoped, tag = 'input window, operand 2, single buffered']
    #allocation8 [shape = 'u8[524288]{0}', space=vmem, size = 0x80000, scoped, tag = 'input window, operand 3, single buffered']
    #allocation9 [shape = 's32[1]{0}', space=sflag, size = 0x4, scoped, tag = 'scoped memory for tpu_custom_call.1']
    #allocation10 [shape = 'u8[4096]{0}', space=vmem, size = 0x1000, scoped, tag = 'output window, operand 0, single buffered']
    %10 = vsyncpa [#allocation3], 0
    %11 = vsyncpa [#allocation6], 0
    %12 = vsyncpa [#allocation9], 0
    %13 = vsyncpa [#allocation4], 0
    // Predicated region
    $region2: #{tpu_custom_call.1} parent=1 // pred_check
      _
    $region3: #{tpu_custom_call.1} parent=1 // pred_check_branch
      %15 = sbr.rel (0) target = $region5
    $region4: #{tpu_custom_call.1} parent=1 // pred_region
      %17 = vsyncadd [#allocation3], 0
      %s19 = sshll.u32 %s0, 4
      %s20 = int_to_ptr.hbm [resolvable:$true] %s19
      %s21 = sshll.u32 [#allocation2], 4
      %s22 = int_to_ptr.vmem [resolvable:$true] %s21
      %24 = dma.hbm_to_vmem [thread:$0]  %s20, 128, %s22, [#allocation3]
    $region5: #{tpu_custom_call.1} parent=1 // pred_fallthru
      _
    // Predicated region
    $region6: #{tpu_custom_call.1} parent=1 // pred_check
      _
    $region7: #{tpu_custom_call.1} parent=1 // pred_check_branch
      %26 = sbr.rel (0) target = $region9
    $region8: #{tpu_custom_call.1} parent=1 // pred_region
      %28 = vsyncadd [#allocation6], 0
      %s29 = sshll.u32 %s1, 4
      %s30 = int_to_ptr.hbm [resolvable:$true] %s29
      %s31 = sshll.u32 [#allocation5], 4
      %s32 = int_to_ptr.vmem [resolvable:$true] %s31
      %37 = dma.hbm_to_vmem [thread:$0]  %s30, 4096, %s32, [#allocation6], 1024, 1024, 64
    $region9: #{tpu_custom_call.1} parent=1 // pred_fallthru
      _
    // Predicated region
    $region10: #{tpu_custom_call.1} parent=1 // pred_check
      _
    $region11: #{tpu_custom_call.1} parent=1 // pred_check_branch
      %39 = sbr.rel (0) target = $region13
    $region12: #{tpu_custom_call.1} parent=1 // pred_region
      %41 = vsyncadd [#allocation6], 0
      %s43 = sshll.u32 %s2, 4
      %s44 = int_to_ptr.hbm [resolvable:$true] %s43
      %s45 = sshll.u32 [#allocation7], 4
      %s46 = int_to_ptr.vmem [resolvable:$true] %s45
      %48 = dma.hbm_to_vmem [thread:$0]  %s44, 128, %s46, [#allocation6]
    $region13: #{tpu_custom_call.1} parent=1 // pred_fallthru
      _
    // Predicated region
    $region14: #{tpu_custom_call.1} parent=1 // pred_check
      _
    $region15: #{tpu_custom_call.1} parent=1 // pred_check_branch
      %50 = sbr.rel (0) target = $region17
    $region16: #{tpu_custom_call.1} parent=1 // pred_region
      %52 = vsyncadd [#allocation9], 0
      %s53 = sshll.u32 %s3, 4
      %s54 = int_to_ptr.hbm [resolvable:$true] %s53
      %s55 = sshll.u32 [#allocation8], 4
      %s56 = int_to_ptr.vmem [resolvable:$true] %s55
      %61 = dma.hbm_to_vmem [thread:$0]  %s54, 16384, %s56, [#allocation9], 128, 128, 8
    $region17: #{tpu_custom_call.1} parent=1 // pred_fallthru
      _
    // Predicated region
    $region18: #{tpu_custom_call.1} parent=1 // pred_check
      _
    $region19: #{tpu_custom_call.1} parent=1 // pred_check_branch
      %63 = sbr.rel (0) target = $region21
    $region20: #{tpu_custom_call.1} parent=1 // pred_region
      _
    $region21: #{tpu_custom_call.1} parent=1 // pred_fallthru
      _
    // Predicated region
    $region22: #{tpu_custom_call.1} parent=1 // pred_check
      _
    $region23: #{tpu_custom_call.1} parent=1 // pred_check_branch
      %65 = sbr.rel (0) target = $region25
    $region24: #{tpu_custom_call.1} parent=1 // pred_region
      %67 = dma.done [#allocation3], 128
    $region25: #{tpu_custom_call.1} parent=1 // pred_fallthru
      _
    // Predicated region
    $region26: #{tpu_custom_call.1} parent=1 // pred_check
      _
    $region27: #{tpu_custom_call.1} parent=1 // pred_check_branch
      %69 = sbr.rel (0) target = $region29
    $region28: #{tpu_custom_call.1} parent=1 // pred_region
      %71 = dma.done [#allocation6], 4096
    $region29: #{tpu_custom_call.1} parent=1 // pred_fallthru
      _
    // Predicated region
    $region30: #{tpu_custom_call.1} parent=1 // pred_check
      _
    $region31: #{tpu_custom_call.1} parent=1 // pred_check_branch
      %73 = sbr.rel (0) target = $region33
    $region32: #{tpu_custom_call.1} parent=1 // pred_region
      %75 = dma.done [#allocation6], 128
    $region33: #{tpu_custom_call.1} parent=1 // pred_fallthru
      _
    // Predicated region
    $region34: #{tpu_custom_call.1} parent=1 // pred_check
      _
    $region35: #{tpu_custom_call.1} parent=1 // pred_check_branch
      %77 = sbr.rel (0) target = $region37
    $region36: #{tpu_custom_call.1} parent=1 // pred_region
      %79 = dma.done [#allocation9], 16384
    $region37: #{tpu_custom_call.1} parent=1 // pred_fallthru
      _
    %v80 = vld [vmem:[#allocation2] sm:$0xff]
    %v81 = vld [vmem:[#allocation5] sm:$0xff]
    %v82 = vld [vmem:[#allocation5 + $0x8] sm:$0xff]
    %v83 = vld [vmem:[#allocation5 + $0x10] sm:$0xff]
    %v84 = vld [vmem:[#allocation5 + $0x18] sm:$0xff]
    %v85 = vld [vmem:[#allocation5 + $0x20] sm:$0xff]
    %v86 = vld [vmem:[#allocation5 + $0x28] sm:$0xff]
    %v87 = vld [vmem:[#allocation5 + $0x30] sm:$0xff]
    %v88 = vld [vmem:[#allocation5 + $0x38] sm:$0xff]
    %v89 = vld [vmem:[#allocation5 + $0x40] sm:$0xff]
    %v90 = vld [vmem:[#allocation5 + $0x48] sm:$0xff]
    %v91 = vld [vmem:[#allocation5 + $0x50] sm:$0xff]
    %v92 = vld [vmem:[#allocation5 + $0x58] sm:$0xff]
    %v93 = vld [vmem:[#allocation5 + $0x60] sm:$0xff]
    %v94 = vld [vmem:[#allocation5 + $0x68] sm:$0xff]
    %v95 = vld [vmem:[#allocation5 + $0x70] sm:$0xff]
    %v96 = vld [vmem:[#allocation5 + $0x78] sm:$0xff]
    %v97 = vld [vmem:[#allocation5 + $0x80] sm:$0xff]
    %v98 = vld [vmem:[#allocation5 + $0x88] sm:$0xff]
    %v99 = vld [vmem:[#allocation5 + $0x90] sm:$0xff]
    %v100 = vld [vmem:[#allocation5 + $0x98] sm:$0xff]
    %v101 = vld [vmem:[#allocation5 + $0xa0] sm:$0xff]
    %v102 = vld [vmem:[#allocation5 + $0xa8] sm:$0xff]
    %v103 = vld [vmem:[#allocation5 + $0xb0] sm:$0xff]
    %v104 = vld [vmem:[#allocation5 + $0xb8] sm:$0xff]
    %v105 = vld [vmem:[#allocation5 + $0xc0] sm:$0xff]
    %v106 = vld [vmem:[#allocation5 + $0xc8] sm:$0xff]
    %v107 = vld [vmem:[#allocation5 + $0xd0] sm:$0xff]
    %v108 = vld [vmem:[#allocation5 + $0xd8] sm:$0xff]
    %v109 = vld [vmem:[#allocation5 + $0xe0] sm:$0xff]
    %v110 = vld [vmem:[#allocation5 + $0xe8] sm:$0xff]
    %v111 = vld [vmem:[#allocation5 + $0xf0] sm:$0xff]
    %v112 = vld [vmem:[#allocation5 + $0xf8] sm:$0xff]
    %v113 = vld [vmem:[#allocation7] sm:$0xff]
    %v115 = vperm.slane %v113, 0
    %v116 = vperm.slane %v113, 1
    %v117 = vperm.slane %v113, 2
    %v118 = vperm.slane %v113, 3
    %v119 = vperm.slane %v113, 4
    %v120 = vperm.slane %v113, 5
    %v121 = vperm.slane %v113, 6
    %v122 = vperm.slane %v113, 7
    %vm131 = vcmask 261120
    %v133 = vsel %vm131, %v80, 0
    %135 = vmatpush.msra.mxu0 0.0
    %136 = vmatpush.msra.mxu0 0.0
    %137 = vmatpush.msra.mxu0 0.0
    %138 = vmatpush.msra.mxu0 0.0
    %139 = vmatpush.msra.mxu0 0.0
    %140 = vmatpush.msra.mxu0 0.0
    %141 = vmatpush.msra.mxu0 0.0
    %142 = vmatpush.msra.mxu0 0.0
    %143 = vmatpush.msra.mxu0 0.0
    %144 = vmatpush.msra.mxu0 0.0
    %145 = vmatpush.msra.mxu0 0.0
    %146 = vmatpush.msra.mxu0 0.0
    %147 = vmatpush.msra.mxu0 %v105
    %148 = vmatpush.msra.mxu0 %v97
    %149 = vmatpush.msra.mxu0 %v89
    %150 = vmatpush.msra.mxu0 %v81
    %151 = vmatmul.f32.gmra.mxu0 %v133
    %v152 = vpop.f32.mrf.mxu0
    %v153 = vadd.f32 %v115, %v152
    %154 = vdwg.mxu0
    %155 = vmatpush.msra.mxu0 0.0
    %156 = vmatpush.msra.mxu0 0.0
    %157 = vmatpush.msra.mxu0 0.0
    %158 = vmatpush.msra.mxu0 0.0
    %159 = vmatpush.msra.mxu0 0.0
    %160 = vmatpush.msra.mxu0 0.0
    %161 = vmatpush.msra.mxu0 0.0
    %162 = vmatpush.msra.mxu0 0.0
    %163 = vmatpush.msra.mxu0 0.0
    %164 = vmatpush.msra.mxu0 0.0
    %165 = vmatpush.msra.mxu0 0.0
    %166 = vmatpush.msra.mxu0 0.0
    %167 = vmatpush.msra.mxu0 %v106
    %168 = vmatpush.msra.mxu0 %v98
    %169 = vmatpush.msra.mxu0 %v90
    %170 = vmatpush.msra.mxu0 %v82
    %171 = vmatmul.f32.gmra.mxu0 %v133
    %v172 = vpop.f32.mrf.mxu0
    %v173 = vadd.f32 %v116, %v172
    %174 = vdwg.mxu0
    %175 = vmatpush.msra.mxu0 0.0
    %176 = vmatpush.msra.mxu0 0.0
    %177 = vmatpush.msra.mxu0 0.0
    %178 = vmatpush.msra.mxu0 0.0
    %179 = vmatpush.msra.mxu0 0.0
    %180 = vmatpush.msra.mxu0 0.0
    %181 = vmatpush.msra.mxu0 0.0
    %182 = vmatpush.msra.mxu0 0.0
    %183 = vmatpush.msra.mxu0 0.0
    %184 = vmatpush.msra.mxu0 0.0
    %185 = vmatpush.msra.mxu0 0.0
    %186 = vmatpush.msra.mxu0 0.0
    %187 = vmatpush.msra.mxu0 %v107
    %188 = vmatpush.msra.mxu0 %v99
    %189 = vmatpush.msra.mxu0 %v91
    %190 = vmatpush.msra.mxu0 %v83
    %191 = vmatmul.f32.gmra.mxu0 %v133
    %v192 = vpop.f32.mrf.mxu0
    %v193 = vadd.f32 %v117, %v192
    %194 = vdwg.mxu0
    %195 = vmatpush.msra.mxu0 0.0
    %196 = vmatpush.msra.mxu0 0.0
    %197 = vmatpush.msra.mxu0 0.0
    %198 = vmatpush.msra.mxu0 0.0
    %199 = vmatpush.msra.mxu0 0.0
    %200 = vmatpush.msra.mxu0 0.0
    %201 = vmatpush.msra.mxu0 0.0
    %202 = vmatpush.msra.mxu0 0.0
    %203 = vmatpush.msra.mxu0 0.0
    %204 = vmatpush.msra.mxu0 0.0
    %205 = vmatpush.msra.mxu0 0.0
    %206 = vmatpush.msra.mxu0 0.0
    %207 = vmatpush.msra.mxu0 %v108
    %208 = vmatpush.msra.mxu0 %v100
    %209 = vmatpush.msra.mxu0 %v92
    %210 = vmatpush.msra.mxu0 %v84
    %211 = vmatmul.f32.gmra.mxu0 %v133
    %v212 = vpop.f32.mrf.mxu0
    %v213 = vadd.f32 %v118, %v212
    %214 = vdwg.mxu0
    %215 = vmatpush.msra.mxu0 0.0
    %216 = vmatpush.msra.mxu0 0.0
    %217 = vmatpush.msra.mxu0 0.0
    %218 = vmatpush.msra.mxu0 0.0
    %219 = vmatpush.msra.mxu0 0.0
    %220 = vmatpush.msra.mxu0 0.0
    %221 = vmatpush.msra.mxu0 0.0
    %222 = vmatpush.msra.mxu0 0.0
    %223 = vmatpush.msra.mxu0 0.0
    %224 = vmatpush.msra.mxu0 0.0
    %225 = vmatpush.msra.mxu0 0.0
    %226 = vmatpush.msra.mxu0 0.0
    %227 = vmatpush.msra.mxu0 %v109
    %228 = vmatpush.msra.mxu0 %v101
    %229 = vmatpush.msra.mxu0 %v93
    %230 = vmatpush.msra.mxu0 %v85
    %231 = vmatmul.f32.gmra.mxu0 %v133
    %v232 = vpop.f32.mrf.mxu0
    %v233 = vadd.f32 %v119, %v232
    %234 = vdwg.mxu0
    %235 = vmatpush.msra.mxu0 0.0
    %236 = vmatpush.msra.mxu0 0.0
    %237 = vmatpush.msra.mxu0 0.0
    %238 = vmatpush.msra.mxu0 0.0
    %239 = vmatpush.msra.mxu0 0.0
    %240 = vmatpush.msra.mxu0 0.0
    %241 = vmatpush.msra.mxu0 0.0
    %242 = vmatpush.msra.mxu0 0.0
    %243 = vmatpush.msra.mxu0 0.0
    %244 = vmatpush.msra.mxu0 0.0
    %245 = vmatpush.msra.mxu0 0.0
    %246 = vmatpush.msra.mxu0 0.0
    %247 = vmatpush.msra.mxu0 %v110
    %248 = vmatpush.msra.mxu0 %v102
    %249 = vmatpush.msra.mxu0 %v94
    %250 = vmatpush.msra.mxu0 %v86
    %251 = vmatmul.f32.gmra.mxu0 %v133
    %v252 = vpop.f32.mrf.mxu0
    %v253 = vadd.f32 %v120, %v252
    %254 = vdwg.mxu0
    %255 = vmatpush.msra.mxu0 0.0
    %256 = vmatpush.msra.mxu0 0.0
    %257 = vmatpush.msra.mxu0 0.0
    %258 = vmatpush.msra.mxu0 0.0
    %259 = vmatpush.msra.mxu0 0.0
    %260 = vmatpush.msra.mxu0 0.0
    %261 = vmatpush.msra.mxu0 0.0
    %262 = vmatpush.msra.mxu0 0.0
    %263 = vmatpush.msra.mxu0 0.0
    %264 = vmatpush.msra.mxu0 0.0
    %265 = vmatpush.msra.mxu0 0.0
    %266 = vmatpush.msra.mxu0 0.0
    %267 = vmatpush.msra.mxu0 %v111
    %268 = vmatpush.msra.mxu0 %v103
    %269 = vmatpush.msra.mxu0 %v95
    %270 = vmatpush.msra.mxu0 %v87
    %271 = vmatmul.f32.gmra.mxu0 %v133
    %v272 = vpop.f32.mrf.mxu0
    %v273 = vadd.f32 %v121, %v272
    %274 = vdwg.mxu0
    %275 = vmatpush.msra.mxu0 0.0
    %276 = vmatpush.msra.mxu0 0.0
    %277 = vmatpush.msra.mxu0 0.0
    %278 = vmatpush.msra.mxu0 0.0
    %279 = vmatpush.msra.mxu0 0.0
    %280 = vmatpush.msra.mxu0 0.0
    %281 = vmatpush.msra.mxu0 0.0
    %282 = vmatpush.msra.mxu0 0.0
    %283 = vmatpush.msra.mxu0 0.0
    %284 = vmatpush.msra.mxu0 0.0
    %285 = vmatpush.msra.mxu0 0.0
    %286 = vmatpush.msra.mxu0 0.0
    %287 = vmatpush.msra.mxu0 %v112
    %288 = vmatpush.msra.mxu0 %v104
    %289 = vmatpush.msra.mxu0 %v96
    %290 = vmatpush.msra.mxu0 %v88
    %291 = vmatmul.f32.gmra.mxu0 %v133
    %v292 = vpop.f32.mrf.mxu0
    %v293 = vadd.f32 %v122, %v292
    %294 = vdwg.mxu0
    %v295 = vmax.f32 %v153, 0.0
    %v296 = vmax.f32 %v173, 0.0
    %v297 = vmax.f32 %v193, 0.0
    %v298 = vmax.f32 %v213, 0.0
    %v299 = vmax.f32 %v233, 0.0
    %v300 = vmax.f32 %v253, 0.0
    %v301 = vmax.f32 %v273, 0.0
    %v302 = vmax.f32 %v293, 0.0
    %v303 = vld [vmem:[#allocation8] sm:$0xff]
    %v304 = vld [vmem:[#allocation8 + $0x8] sm:$0xff]
    %v305 = vld [vmem:[#allocation8 + $0x10] sm:$0xff]
    %v306 = vld [vmem:[#allocation8 + $0x18] sm:$0xff]
    %v307 = vld [vmem:[#allocation8 + $0x20] sm:$0xff]
    %v308 = vld [vmem:[#allocation8 + $0x28] sm:$0xff]
    %v309 = vld [vmem:[#allocation8 + $0x30] sm:$0xff]
    %v310 = vld [vmem:[#allocation8 + $0x38] sm:$0xff]
    %v311 = vld [vmem:[#allocation8 + $0x40] sm:$0xff]
    %v312 = vld [vmem:[#allocation8 + $0x48] sm:$0xff]
    %v313 = vld [vmem:[#allocation8 + $0x50] sm:$0xff]
    %v314 = vld [vmem:[#allocation8 + $0x58] sm:$0xff]
    %v315 = vld [vmem:[#allocation8 + $0x60] sm:$0xff]
    %v316 = vld [vmem:[#allocation8 + $0x68] sm:$0xff]
    %v317 = vld [vmem:[#allocation8 + $0x70] sm:$0xff]
    %v318 = vld [vmem:[#allocation8 + $0x78] sm:$0xff]
    %v319 = vld [vmem:[#allocation8 + $0x80] sm:$0xff]
    %v320 = vld [vmem:[#allocation8 + $0x88] sm:$0xff]
    %v321 = vld [vmem:[#allocation8 + $0x90] sm:$0xff]
    %v322 = vld [vmem:[#allocation8 + $0x98] sm:$0xff]
    %v323 = vld [vmem:[#allocation8 + $0xa0] sm:$0xff]
    %v324 = vld [vmem:[#allocation8 + $0xa8] sm:$0xff]
    %v325 = vld [vmem:[#allocation8 + $0xb0] sm:$0xff]
    %v326 = vld [vmem:[#allocation8 + $0xb8] sm:$0xff]
    %v327 = vld [vmem:[#allocation8 + $0xc0] sm:$0xff]
    %v328 = vld [vmem:[#allocation8 + $0xc8] sm:$0xff]
    %v329 = vld [vmem:[#allocation8 + $0xd0] sm:$0xff]
    %v330 = vld [vmem:[#allocation8 + $0xd8] sm:$0xff]
    %v331 = vld [vmem:[#allocation8 + $0xe0] sm:$0xff]
    %v332 = vld [vmem:[#allocation8 + $0xe8] sm:$0xff]
    %v333 = vld [vmem:[#allocation8 + $0xf0] sm:$0xff]
    %v334 = vld [vmem:[#allocation8 + $0xf8] sm:$0xff]
    %v335 = vld [vmem:[#allocation8 + $0x100] sm:$0xff]
    %v336 = vld [vmem:[#allocation8 + $0x108] sm:$0xff]
    %v337 = vld [vmem:[#allocation8 + $0x110] sm:$0xff]
    %v338 = vld [vmem:[#allocation8 + $0x118] sm:$0xff]
    %v339 = vld [vmem:[#allocation8 + $0x120] sm:$0xff]
    %v340 = vld [vmem:[#allocation8 + $0x128] sm:$0xff]
    %v341 = vld [vmem:[#allocation8 + $0x130] sm:$0xff]
    %v342 = vld [vmem:[#allocation8 + $0x138] sm:$0xff]
    %v343 = vld [vmem:[#allocation8 + $0x140] sm:$0xff]
    %v344 = vld [vmem:[#allocation8 + $0x148] sm:$0xff]
    %v345 = vld [vmem:[#allocation8 + $0x150] sm:$0xff]
    %v346 = vld [vmem:[#allocation8 + $0x158] sm:$0xff]
    %v347 = vld [vmem:[#allocation8 + $0x160] sm:$0xff]
    %v348 = vld [vmem:[#allocation8 + $0x168] sm:$0xff]
    %v349 = vld [vmem:[#allocation8 + $0x170] sm:$0xff]
    %v350 = vld [vmem:[#allocation8 + $0x178] sm:$0xff]
    %v351 = vld [vmem:[#allocation8 + $0x180] sm:$0xff]
    %v352 = vld [vmem:[#allocation8 + $0x188] sm:$0xff]
    %v353 = vld [vmem:[#allocation8 + $0x190] sm:$0xff]
    %v354 = vld [vmem:[#allocation8 + $0x198] sm:$0xff]
    %v355 = vld [vmem:[#allocation8 + $0x1a0] sm:$0xff]
    %v356 = vld [vmem:[#allocation8 + $0x1a8] sm:$0xff]
    %v357 = vld [vmem:[#allocation8 + $0x1b0] sm:$0xff]
    %v358 = vld [vmem:[#allocation8 + $0x1b8] sm:$0xff]
    %v359 = vld [vmem:[#allocation8 + $0x1c0] sm:$0xff]
    %v360 = vld [vmem:[#allocation8 + $0x1c8] sm:$0xff]
    %v361 = vld [vmem:[#allocation8 + $0x1d0] sm:$0xff]
    %v362 = vld [vmem:[#allocation8 + $0x1d8] sm:$0xff]
    %v363 = vld [vmem:[#allocation8 + $0x1e0] sm:$0xff]
    %v364 = vld [vmem:[#allocation8 + $0x1e8] sm:$0xff]
    %v365 = vld [vmem:[#allocation8 + $0x1f0] sm:$0xff]
    %v366 = vld [vmem:[#allocation8 + $0x1f8] sm:$0xff]
    %v367 = vld [vmem:[#allocation8 + $0x200] sm:$0xff]
    %v368 = vld [vmem:[#allocation8 + $0x208] sm:$0xff]
    %v369 = vld [vmem:[#allocation8 + $0x210] sm:$0xff]
    %v370 = vld [vmem:[#allocation8 + $0x218] sm:$0xff]
    %v371 = vld [vmem:[#allocation8 + $0x220] sm:$0xff]
    %v372 = vld [vmem:[#allocation8 + $0x228] sm:$0xff]
    %v373 = vld [vmem:[#allocation8 + $0x230] sm:$0xff]
    %v374 = vld [vmem:[#allocation8 + $0x238] sm:$0xff]
    %v375 = vld [vmem:[#allocation8 + $0x240] sm:$0xff]
    %v376 = vld [vmem:[#allocation8 + $0x248] sm:$0xff]
    %v377 = vld [vmem:[#allocation8 + $0x250] sm:$0xff]
    %v378 = vld [vmem:[#allocation8 + $0x258] sm:$0xff]
    %v379 = vld [vmem:[#allocation8 + $0x260] sm:$0xff]
    %v380 = vld [vmem:[#allocation8 + $0x268] sm:$0xff]
    %v381 = vld [vmem:[#allocation8 + $0x270] sm:$0xff]
    %v382 = vld [vmem:[#allocation8 + $0x278] sm:$0xff]
    %v383 = vld [vmem:[#allocation8 + $0x280] sm:$0xff]
    %v384 = vld [vmem:[#allocation8 + $0x288] sm:$0xff]
    %v385 = vld [vmem:[#allocation8 + $0x290] sm:$0xff]
    %v386 = vld [vmem:[#allocation8 + $0x298] sm:$0xff]
    %v387 = vld [vmem:[#allocation8 + $0x2a0] sm:$0xff]
    %v388 = vld [vmem:[#allocation8 + $0x2a8] sm:$0xff]
    %v389 = vld [vmem:[#allocation8 + $0x2b0] sm:$0xff]
    %v390 = vld [vmem:[#allocation8 + $0x2b8] sm:$0xff]
    %v391 = vld [vmem:[#allocation8 + $0x2c0] sm:$0xff]
    %v392 = vld [vmem:[#allocation8 + $0x2c8] sm:$0xff]
    %v393 = vld [vmem:[#allocation8 + $0x2d0] sm:$0xff]
    %v394 = vld [vmem:[#allocation8 + $0x2d8] sm:$0xff]
    %v395 = vld [vmem:[#allocation8 + $0x2e0] sm:$0xff]
    %v396 = vld [vmem:[#allocation8 + $0x2e8] sm:$0xff]
    %v397 = vld [vmem:[#allocation8 + $0x2f0] sm:$0xff]
    %v398 = vld [vmem:[#allocation8 + $0x2f8] sm:$0xff]
    %v399 = vld [vmem:[#allocation8 + $0x300] sm:$0xff]
    %v400 = vld [vmem:[#allocation8 + $0x308] sm:$0xff]
    %v401 = vld [vmem:[#allocation8 + $0x310] sm:$0xff]
    %v402 = vld [vmem:[#allocation8 + $0x318] sm:$0xff]
    %v403 = vld [vmem:[#allocation8 + $0x320] sm:$0xff]
    %v404 = vld [vmem:[#allocation8 + $0x328] sm:$0xff]
    %v405 = vld [vmem:[#allocation8 + $0x330] sm:$0xff]
    %v406 = vld [vmem:[#allocation8 + $0x338] sm:$0xff]
    %v407 = vld [vmem:[#allocation8 + $0x340] sm:$0xff]
    %v408 = vld [vmem:[#allocation8 + $0x348] sm:$0xff]
    %v409 = vld [vmem:[#allocation8 + $0x350] sm:$0xff]
    %v410 = vld [vmem:[#allocation8 + $0x358] sm:$0xff]
    %v411 = vld [vmem:[#allocation8 + $0x360] sm:$0xff]
    %v412 = vld [vmem:[#allocation8 + $0x368] sm:$0xff]
    %v413 = vld [vmem:[#allocation8 + $0x370] sm:$0xff]
    %v414 = vld [vmem:[#allocation8 + $0x378] sm:$0xff]
    %v415 = vld [vmem:[#allocation8 + $0x380] sm:$0xff]
    %v416 = vld [vmem:[#allocation8 + $0x388] sm:$0xff]
    %v417 = vld [vmem:[#allocation8 + $0x390] sm:$0xff]
    %v418 = vld [vmem:[#allocation8 + $0x398] sm:$0xff]
    %v419 = vld [vmem:[#allocation8 + $0x3a0] sm:$0xff]
    %v420 = vld [vmem:[#allocation8 + $0x3a8] sm:$0xff]
    %v421 = vld [vmem:[#allocation8 + $0x3b0] sm:$0xff]
    %v422 = vld [vmem:[#allocation8 + $0x3b8] sm:$0xff]
    %v423 = vld [vmem:[#allocation8 + $0x3c0] sm:$0xff]
    %v424 = vld [vmem:[#allocation8 + $0x3c8] sm:$0xff]
    %v425 = vld [vmem:[#allocation8 + $0x3d0] sm:$0xff]
    %v426 = vld [vmem:[#allocation8 + $0x3d8] sm:$0xff]
    %v427 = vld [vmem:[#allocation8 + $0x3e0] sm:$0xff]
    %v428 = vld [vmem:[#allocation8 + $0x3e8] sm:$0xff]
    %v429 = vld [vmem:[#allocation8 + $0x3f0] sm:$0xff]
    %v430 = vld [vmem:[#allocation8 + $0x3f8] sm:$0xff]
    %v431 = vld [vmem:[%s4] sm:$0x1]
    %v433 = vperm.slane %v431, 0
    %435 = vmatpush.msra.mxu0 %v318
    %436 = vmatpush.msra.mxu0 %v317
    %437 = vmatpush.msra.mxu0 %v316
    %438 = vmatpush.msra.mxu0 %v315
    %439 = vmatpush.msra.mxu0 %v314
    %440 = vmatpush.msra.mxu0 %v313
    %441 = vmatpush.msra.mxu0 %v312
    %442 = vmatpush.msra.mxu0 %v311
    %443 = vmatpush.msra.mxu0 %v310
    %444 = vmatpush.msra.mxu0 %v309
    %445 = vmatpush.msra.mxu0 %v308
    %446 = vmatpush.msra.mxu0 %v307
    %447 = vmatpush.msra.mxu0 %v306
    %448 = vmatpush.msra.mxu0 %v305
    %449 = vmatpush.msra.mxu0 %v304
    %450 = vmatpush.msra.mxu0 %v303
    %451 = vmatmul.f32.gmra.mxu0 %v295
    %v452 = vpop.f32.mrf.mxu0
    %v453 = vadd.f32 %v433, %v452
    %454 = vdwg.mxu0
    %455 = vmatpush.msra.mxu0 %v334
    %456 = vmatpush.msra.mxu0 %v333
    %457 = vmatpush.msra.mxu0 %v332
    %458 = vmatpush.msra.mxu0 %v331
    %459 = vmatpush.msra.mxu0 %v330
    %460 = vmatpush.msra.mxu0 %v329
    %461 = vmatpush.msra.mxu0 %v328
    %462 = vmatpush.msra.mxu0 %v327
    %463 = vmatpush.msra.mxu0 %v326
    %464 = vmatpush.msra.mxu0 %v325
    %465 = vmatpush.msra.mxu0 %v324
    %466 = vmatpush.msra.mxu0 %v323
    %467 = vmatpush.msra.mxu0 %v322
    %468 = vmatpush.msra.mxu0 %v321
    %469 = vmatpush.msra.mxu0 %v320
    %470 = vmatpush.msra.mxu0 %v319
    %471 = vmatmul.f32.gmra.mxu0 %v296
    %v472 = vpop.f32.mrf.mxu0
    %v473 = vadd.f32 %v453, %v472
    %474 = vdwg.mxu0
    %475 = vmatpush.msra.mxu0 %v350
    %476 = vmatpush.msra.mxu0 %v349
    %477 = vmatpush.msra.mxu0 %v348
    %478 = vmatpush.msra.mxu0 %v347
    %479 = vmatpush.msra.mxu0 %v346
    %480 = vmatpush.msra.mxu0 %v345
    %481 = vmatpush.msra.mxu0 %v344
    %482 = vmatpush.msra.mxu0 %v343
    %483 = vmatpush.msra.mxu0 %v342
    %484 = vmatpush.msra.mxu0 %v341
    %485 = vmatpush.msra.mxu0 %v340
    %486 = vmatpush.msra.mxu0 %v339
    %487 = vmatpush.msra.mxu0 %v338
    %488 = vmatpush.msra.mxu0 %v337
    %489 = vmatpush.msra.mxu0 %v336
    %490 = vmatpush.msra.mxu0 %v335
    %491 = vmatmul.f32.gmra.mxu0 %v297
    %v492 = vpop.f32.mrf.mxu0
    %v493 = vadd.f32 %v473, %v492
    %494 = vdwg.mxu0
    %495 = vmatpush.msra.mxu0 %v366
    %496 = vmatpush.msra.mxu0 %v365
    %497 = vmatpush.msra.mxu0 %v364
    %498 = vmatpush.msra.mxu0 %v363
    %499 = vmatpush.msra.mxu0 %v362
    %500 = vmatpush.msra.mxu0 %v361
    %501 = vmatpush.msra.mxu0 %v360
    %502 = vmatpush.msra.mxu0 %v359
    %503 = vmatpush.msra.mxu0 %v358
    %504 = vmatpush.msra.mxu0 %v357
    %505 = vmatpush.msra.mxu0 %v356
    %506 = vmatpush.msra.mxu0 %v355
    %507 = vmatpush.msra.mxu0 %v354
    %508 = vmatpush.msra.mxu0 %v353
    %509 = vmatpush.msra.mxu0 %v352
    %510 = vmatpush.msra.mxu0 %v351
    %511 = vmatmul.f32.gmra.mxu0 %v298
    %v512 = vpop.f32.mrf.mxu0
    %v513 = vadd.f32 %v493, %v512
    %514 = vdwg.mxu0
    %515 = vmatpush.msra.mxu0 %v382
    %516 = vmatpush.msra.mxu0 %v381
    %517 = vmatpush.msra.mxu0 %v380
    %518 = vmatpush.msra.mxu0 %v379
    %519 = vmatpush.msra.mxu0 %v378
    %520 = vmatpush.msra.mxu0 %v377
    %521 = vmatpush.msra.mxu0 %v376
    %522 = vmatpush.msra.mxu0 %v375
    %523 = vmatpush.msra.mxu0 %v374
    %524 = vmatpush.msra.mxu0 %v373
    %525 = vmatpush.msra.mxu0 %v372
    %526 = vmatpush.msra.mxu0 %v371
    %527 = vmatpush.msra.mxu0 %v370
    %528 = vmatpush.msra.mxu0 %v369
    %529 = vmatpush.msra.mxu0 %v368
    %530 = vmatpush.msra.mxu0 %v367
    %531 = vmatmul.f32.gmra.mxu0 %v299
    %v532 = vpop.f32.mrf.mxu0
    %v533 = vadd.f32 %v513, %v532
    %534 = vdwg.mxu0
    %535 = vmatpush.msra.mxu0 %v398
    %536 = vmatpush.msra.mxu0 %v397
    %537 = vmatpush.msra.mxu0 %v396
    %538 = vmatpush.msra.mxu0 %v395
    %539 = vmatpush.msra.mxu0 %v394
    %540 = vmatpush.msra.mxu0 %v393
    %541 = vmatpush.msra.mxu0 %v392
    %542 = vmatpush.msra.mxu0 %v391
    %543 = vmatpush.msra.mxu0 %v390
    %544 = vmatpush.msra.mxu0 %v389
    %545 = vmatpush.msra.mxu0 %v388
    %546 = vmatpush.msra.mxu0 %v387
    %547 = vmatpush.msra.mxu0 %v386
    %548 = vmatpush.msra.mxu0 %v385
    %549 = vmatpush.msra.mxu0 %v384
    %550 = vmatpush.msra.mxu0 %v383
    %551 = vmatmul.f32.gmra.mxu0 %v300
    %v552 = vpop.f32.mrf.mxu0
    %v553 = vadd.f32 %v533, %v552
    %554 = vdwg.mxu0
    %555 = vmatpush.msra.mxu0 %v414
    %556 = vmatpush.msra.mxu0 %v413
    %557 = vmatpush.msra.mxu0 %v412
    %558 = vmatpush.msra.mxu0 %v411
    %559 = vmatpush.msra.mxu0 %v410
    %560 = vmatpush.msra.mxu0 %v409
    %561 = vmatpush.msra.mxu0 %v408
    %562 = vmatpush.msra.mxu0 %v407
    %563 = vmatpush.msra.mxu0 %v406
    %564 = vmatpush.msra.mxu0 %v405
    %565 = vmatpush.msra.mxu0 %v404
    %566 = vmatpush.msra.mxu0 %v403
    %567 = vmatpush.msra.mxu0 %v402
    %568 = vmatpush.msra.mxu0 %v401
    %569 = vmatpush.msra.mxu0 %v400
    %570 = vmatpush.msra.mxu0 %v399
    %571 = vmatmul.f32.gmra.mxu0 %v301
    %v572 = vpop.f32.mrf.mxu0
    %v573 = vadd.f32 %v553, %v572
    %574 = vdwg.mxu0
    %575 = vmatpush.msra.mxu0 %v430
    %576 = vmatpush.msra.mxu0 %v429
    %577 = vmatpush.msra.mxu0 %v428
    %578 = vmatpush.msra.mxu0 %v427
    %579 = vmatpush.msra.mxu0 %v426
    %580 = vmatpush.msra.mxu0 %v425
    %581 = vmatpush.msra.mxu0 %v424
    %582 = vmatpush.msra.mxu0 %v423
    %583 = vmatpush.msra.mxu0 %v422
    %584 = vmatpush.msra.mxu0 %v421
    %585 = vmatpush.msra.mxu0 %v420
    %586 = vmatpush.msra.mxu0 %v419
    %587 = vmatpush.msra.mxu0 %v418
    %588 = vmatpush.msra.mxu0 %v417
    %589 = vmatpush.msra.mxu0 %v416
    %590 = vmatpush.msra.mxu0 %v415
    %591 = vmatmul.f32.gmra.mxu0 %v302
    %v592 = vpop.f32.mrf.mxu0
    %v593 = vadd.f32 %v573, %v592
    %594 = vdwg.mxu0
    %595 = vst [vmem:[#allocation10] sm:$0xff] %v593
    // Predicated region
    $region38: #{tpu_custom_call.1} parent=1 // pred_check
      _
    $region39: #{tpu_custom_call.1} parent=1 // pred_check_branch
      %597 = sbr.rel (0) target = $region41
    $region40: #{tpu_custom_call.1} parent=1 // pred_region
      %599 = vsyncadd [#allocation4], 0
      %s601 = sshll.u32 [#allocation10], 4
      %s602 = int_to_ptr.vmem [resolvable:$true] %s601
      %s603 = sshll.u32 %s5, 4
      %s604 = int_to_ptr.hbm [resolvable:$true] %s603
      %606 = dma.vmem_to_hbm [thread:$0]  %s602, 128, %s604, [#allocation4]
    $region41: #{tpu_custom_call.1} parent=1 // pred_fallthru
      _
    // Predicated region
    $region42: #{tpu_custom_call.1} parent=1 // pred_check
      _
    $region43: #{tpu_custom_call.1} parent=1 // pred_check_branch
      %608 = sbr.rel (0) target = $region45
    $region44: #{tpu_custom_call.1} parent=1 // pred_region
      %610 = dma.done [#allocation4], 128
    $region45: #{tpu_custom_call.1} parent=1 // pred_fallthru
      _
    %611 = vsyncpa [#allocation3], 1
    %612 = vsyncpa [#allocation6], 1
    %613 = vsyncpa [#allocation9], 1
    %614 = vsyncpa [#allocation4], 1

</llo_original>
